<compile_context>
chip_gen: v7x
topology: tpu7x:2x2x1
jax: 0.10.0
libtpu: 0.0.40
codegen_flags: <defaults>
</compile_context>

<pallas_src>
import math

import numpy as np
import jax
import jax.numpy as jnp
from jax.experimental import pallas as pl
from jax.experimental.pallas import tpu as pltpu


def _blur_down_kernel(x_ref, hmat_ref, topmask_ref, o_ref):
    """3x3 [1,2,1]x[1,2,1]/16 reflect-pad blur at stride 2 for one plane group.

    x_ref:       (2*R, W)   input rows of `gp` whole planes stacked on sublanes
    hmat_ref:    (W, Wo)    constant horizontal filter + stride-2 + left-reflect
    topmask_ref: (R, 1)     1.0 on rows that are a plane's first output row
    o_ref:       (R, Wo)    output rows of the same planes, R = gp * Ho
    """
    r_out = o_ref.shape[0]

    # ---- vertical [1, 2, 1] at stride 2 (f32 accumulation) -----------------
    mid = x_ref[pl.ds(0, r_out, stride=2), :].astype(jnp.float32)   # row 2s
    bot = x_ref[pl.ds(1, r_out, stride=2), :].astype(jnp.float32)   # row 2s+1
    if r_out > 1:
        prev = jnp.concatenate([bot[:1], bot[:-1]], axis=0)         # row 2s-1
    else:
        prev = bot
    # Reflect pad at each plane's top: the row above row 0 mirrors to row 1,
    # which is exactly `bot` of that output row -> select via the constant mask.
    top = jnp.where(topmask_ref[...] > 0.5, bot, prev)
    v = (top + bot) + (mid + mid)                                    # (R, W)

    # ---- horizontal [1, 2, 1]/16 at stride 2 + left reflect, on the MXU ----
    o_ref[...] = jnp.dot(
        v, hmat_ref[...],
        preferred_element_type=jnp.float32,
        precision=jax.lax.Precision.HIGHEST,
    ).astype(o_ref.dtype)


def _hblur_matrix(W, Wo):
    """Constant (W, Wo) matrix: horizontal [1,2,1]/16, stride 2, left reflect."""
    c = np.arange(W)[:, None]
    j = np.arange(Wo)[None, :]
    s = ((c == 2 * j - 1).astype(np.float64)
         + 2.0 * (c == 2 * j).astype(np.float64)
         + (c == 2 * j + 1).astype(np.float64))
    s[1, 0] += 1.0                          # reflect: padded col -1 mirrors col 1
    return jnp.asarray(s / 16.0, dtype=jnp.float32)


def _vmem_budget_and_limit():
    """Generation-aware scoped-VMEM request + double-buffered working-set target."""
    cap = 64 << 20                          # assume smallest per-core VMEM (v7x) if unknown
    try:
        cap = int(pltpu.get_tpu_info().vmem_capacity_bytes)
    except Exception:
        pass
    limit = min(3 * cap // 4, 64 << 20)     # 64 MiB on v5e/v6e, 48 MiB on v7x
    return limit // 2, limit


def _pick_planes_per_block(N, H, W, Ho, Wo, itemsize, budget, override=None):
    """Number of whole (b, c) planes processed per grid step."""
    align = 8 // math.gcd(Ho, 8)            # keep block sublane dims 8-aligned
    if override is not None:
        gp = max(1, min(int(override), N))
        if gp < N:
            gp = max(align, (gp // align) * align)
        return min(gp, N)
    if align >= N:
        return N                            # full-dim blocks are always legal
    # double-buffered in + out blocks, plus the (R, 1) top-row mask VMEM cost
    per_plane = 2 * (H * W + Ho * Wo) * itemsize + 2 * Ho * 512
    by_budget = max(1, budget // max(per_plane, 1))
    by_steps = max(1, N // 4)               # keep >= 4 grid steps (v7x dual-TC)
    gp = min(by_budget, by_steps, N)
    gp = max(align, (gp // align) * align)
    return N if gp >= N else gp


def downsample(x_nchw, *, planes_per_block=None):
    """Pallas equivalent of Downsample(C, 'reflect', filt_size=3, stride=2).forward."""
    B, C, H, W = x_nchw.shape
    # TODO(synk): only the module's default branch (reflect pad, filt_size=3,
    # stride=2, pad_off=0) with even H/W is implemented; other filt_size /
    # pad_type / stride / pad_off branches are not.
    assert H % 2 == 0 and W % 2 == 0, "even spatial dims only"
    N = B * C
    Ho, Wo = H // 2, W // 2
    itemsize = jnp.dtype(x_nchw.dtype).itemsize

    budget, vmem_limit = _vmem_budget_and_limit()
    gp = _pick_planes_per_block(N, H, W, Ho, Wo, itemsize, budget, planes_per_block)
    # TODO(synk): a single plane larger than the VMEM budget (H*W >~ 2M f32
    # elements) would need row tiling with a carried halo; irrelevant for
    # MINet-sized feature maps.

    x2 = x_nchw.reshape(N * H, W)                    # free view (no HBM pass)
    hmat = _hblur_matrix(W, Wo)
    topmask = np.zeros((gp * Ho, 1), np.float32)
    topmask[0::Ho] = 1.0
    topmask = jnp.asarray(topmask)

    grid = (pl.cdiv(N, gp),)
    out2 = pl.pallas_call(
        _blur_down_kernel,
        out_shape=jax.ShapeDtypeStruct((N * Ho, Wo), x_nchw.dtype),
        grid=grid,
        in_specs=[
            pl.BlockSpec((gp * H, W), lambda g: (g, 0)),    # gp stacked planes
            pl.BlockSpec((W, Wo), lambda g: (0, 0)),        # constant, copied once
            pl.BlockSpec((gp * Ho, 1), lambda g: (0, 0)),   # constant, copied once
        ],
        out_specs=pl.BlockSpec((gp * Ho, Wo), lambda g: (g, 0)),
        compiler_params=pltpu.CompilerParams(
            dimension_semantics=("parallel",),
            vmem_limit_bytes=vmem_limit,
        ),
        cost_estimate=pl.CostEstimate(
            flops=int(2 * N * Ho * Wo * W + 4 * N * Ho * W),
            transcendentals=0,
            bytes_accessed=int((N * H * W + N * Ho * Wo) * itemsize + 4 * W * Wo),
        ),
    )(x2, hmat, topmask)

    return out2.reshape(B, C, Ho, Wo)                # free view back to NCHW


def reference(x_nchw):
    """Plain-JAX reference: F.conv2d(reflect_pad(x), blur3x3, stride=2, groups=C)."""
    B, C, H, W = x_nchw.shape
    a = jnp.array([1.0, 2.0, 1.0], jnp.float32)
    filt = (a[:, None] * a[None, :]) / 16.0
    xpad = jnp.pad(x_nchw, ((0, 0), (0, 0), (1, 1), (1, 1)), mode="reflect")
    w = jnp.broadcast_to(filt[None, None, :, :], (C, 1, 3, 3)).astype(x_nchw.dtype)
    return jax.lax.conv_general_dilated(
        xpad, w,
        window_strides=(2, 2),
        padding="VALID",
        feature_group_count=C,
        dimension_numbers=("NCHW", "OIHW", "NCHW"),
        precision=jax.lax.Precision.HIGHEST,
    )


if __name__ == "__main__":
    # Primary demo shape (matches the module's small-test config).
    B, C, H, W = 2, 4, 16, 16
    x = jax.random.normal(jax.random.PRNGKey(0), (B, C, H, W), dtype=jnp.float32)

    y = jax.block_until_ready(downsample(x))
    assert y.shape == (B, C, H // 2, W // 2), y.shape
    np.testing.assert_allclose(np.asarray(y), np.asarray(reference(x)),
                               rtol=1e-5, atol=1e-5)

    # Second case: many planes with a forced group size so the cdiv grid has a
    # partial (masked) last plane group: 192 planes / 40 -> 5 steps.
    B2, C2, H2, W2 = 2, 96, 32, 32
    x2 = jax.random.normal(jax.random.PRNGKey(1), (B2, C2, H2, W2), dtype=jnp.float32)
    y2 = jax.block_until_ready(downsample(x2, planes_per_block=40))
    np.testing.assert_allclose(np.asarray(y2), np.asarray(reference(x2)),
                               rtol=1e-5, atol=1e-5)

    print("KERNEL_OK")
</pallas_src>

<mosaic_0001>
module attributes {stable_mosaic.version = 11 : i64} {
  func.func @_blur_down_kernel(%arg0: i32, %arg1: memref<32x16xf32, #tpu.memory_space<vmem>>, %arg2: memref<16x8xf32, #tpu.memory_space<vmem>>, %arg3: memref<16x1xf32, #tpu.memory_space<vmem>>, %arg4: memref<16x8xf32, #tpu.memory_space<vmem>>) attributes {dimension_semantics = [#tpu.dimension_semantics<parallel>], iteration_bounds = array<i64: 4>, scalar_prefetch = 0 : i64, scratch_operands = 0 : i64, tpu.core_type = #tpu.core_type<tc>, window_params = [{transform_indices = @transform_0, window_bounds = array<i64: 32, 16>}, {pipeline_mode = #tpu.pipeline_mode<synchronous>, transform_indices = @transform_1, window_bounds = array<i64: 16, 8>}, {pipeline_mode = #tpu.pipeline_mode<synchronous>, transform_indices = @transform_2, window_bounds = array<i64: 16, 1>}, {transform_indices = @transform_3, window_bounds = array<i64: 16, 8>}]} {
    %c0 = arith.constant 0 : index
    %c0_0 = arith.constant 0 : index
    %0 = tpu.strided_load %arg1[%c0, %c0_0] {strides = array<i32: 2, 1>} : memref<32x16xf32, #tpu.memory_space<vmem>>, vector<16x16xf32>
    %c1 = arith.constant 1 : index
    %c0_1 = arith.constant 0 : index
    %1 = tpu.strided_load %arg1[%c1, %c0_1] {strides = array<i32: 2, 1>} : memref<32x16xf32, #tpu.memory_space<vmem>>, vector<16x16xf32>
    %2 = vector.extract_strided_slice %1 {offsets = [0, 0], sizes = [1, 16], strides = [1, 1]} : vector<16x16xf32> to vector<1x16xf32>
    %3 = vector.extract_strided_slice %1 {offsets = [0, 0], sizes = [15, 16], strides = [1, 1]} : vector<16x16xf32> to vector<15x16xf32>
    %4 = tpu.concatenate %2, %3 in 0 : vector<1x16xf32>, vector<15x16xf32> -> vector<16x16xf32>
    %c0_2 = arith.constant 0 : index
    %c0_3 = arith.constant 0 : index
    %5 = vector.load %arg3[%c0_2, %c0_3] : memref<16x1xf32, #tpu.memory_space<vmem>>, vector<16x1xf32>
    %cst = arith.constant 5.000000e-01 : f32
    %6 = vector.broadcast %cst : f32 to vector<16x1xf32>
    %7 = arith.cmpf ogt, %5, %6 : vector<16x1xf32>
    %8 = vector.shape_cast %7 : vector<16x1xi1> to vector<16x1xi1>
    %9 = vector.broadcast %8 : vector<16x1xi1> to vector<16x16xi1>
    %10 = arith.select %9, %1, %4 : vector<16x16xi1>, vector<16x16xf32>
    %11 = arith.addf %10, %1 : vector<16x16xf32>
    %12 = arith.addf %0, %0 : vector<16x16xf32>
    %13 = arith.addf %11, %12 : vector<16x16xf32>
    %c0_4 = arith.constant 0 : index
    %c0_5 = arith.constant 0 : index
    %14 = vector.load %arg2[%c0_4, %c0_5] : memref<16x8xf32, #tpu.memory_space<vmem>>, vector<16x8xf32>
    %cst_6 = arith.constant dense<0.000000e+00> : vector<16x8xf32>
    %15 = tpu.matmul %13, %14, %cst_6 {dimension_numbers = #tpu.dot_dimension_numbers<[1], [0], [0], [1], [0, 0, 1, 1], [], []>, precision = #tpu.contract_precision<fp32>} : vector<16x16xf32>, vector<16x8xf32>, vector<16x8xf32> -> vector<16x8xf32>
    %c0_7 = arith.constant 0 : index
    %c0_8 = arith.constant 0 : index
    %16 = vector.load %arg4[%c0_7, %c0_8] : memref<16x8xf32, #tpu.memory_space<vmem>>, vector<16x8xf32>
    tpu.vector_store %arg4[%c0_7, %c0_8], %15 {strides = array<i32>} : memref<16x8xf32, #tpu.memory_space<vmem>>, vector<16x8xf32>,
    return
  }
  func.func @transform_0(%arg0: i32) -> (i32, i32) {
    %c0_i32 = arith.constant 0 : i32
    %c0_i32_0 = arith.constant 0 : i32
    return %arg0, %c0_i32 : i32, i32
  }
  func.func @transform_1(%arg0: i32) -> (i32, i32) {
    %c0_i32 = arith.constant 0 : i32
    %c0_i32_0 = arith.constant 0 : i32
    %c0_i32_1 = arith.constant 0 : i32
    return %c0_i32, %c0_i32_0 : i32, i32
  }
  func.func @transform_2(%arg0: i32) -> (i32, i32) {
    %c0_i32 = arith.constant 0 : i32
    %c0_i32_0 = arith.constant 0 : i32
    %c0_i32_1 = arith.constant 0 : i32
    return %c0_i32, %c0_i32_0 : i32, i32
  }
  func.func @transform_3(%arg0: i32) -> (i32, i32) {
    %c0_i32 = arith.constant 0 : i32
    %c0_i32_0 = arith.constant 0 : i32
    return %arg0, %c0_i32 : i32, i32
  }
}

</mosaic_0001>

<llo_original>
// kernel: tpu_custom_call.1
$region0: #{tpu_custom_call.1}
  #allocation0 [shape = 'u32[]', space=smem, size = 0x4, offset = 0x4, fixed_abs, tag = 'smem constant byte address 0x4 - core index']
  #allocation1 [shape = 'u32[144,128]{1,0:T(1,128)}', space=vmem, size = 0x12000, scoped, tag = 'internal scratch']
  %s0 = inlined_call_operand.vmem [shape: f32[128,16], index: 0, kind: input, shape index: {}]
  %s1 = inlined_call_operand.vmem [shape: f32[16,8], index: 1, kind: input, shape index: {}]
  %s2 = inlined_call_operand.vmem [shape: f32[16,1], index: 2, kind: input, shape index: {}]
  %s3 = inlined_call_operand.vmem [shape: f32[64,8], index: 3, kind: output, shape index: {}]
  %s4 = sld [smem:[#allocation0]]
  $region45: #{tpu_custom_call.1} parent=0
    _
  %s6 = ssub.s32 1, %s4
  %s7 = scalar_select 0, %s6, %s4
  loop: start=0, step=1, limit=6
  $region2: #{tpu_custom_call.1} parent=0 // loop_pre_header
    _
  $region3: #{tpu_custom_call.1} parent=0 // loop_header
    %s9 = sphi 0, %s13
    %p10 = scmp.ge.s32.totalorder %s9, 6
    %s19 = sphi 0, %s21
    %s22 = sphi 0, %s19
    %s23 = sphi 0, %s22
    %s39 = sphi 0, %s23
    %s43 = sphi 0, %s43
    %s45 = sphi 0, %s43
    %s46 = sphi 0, %s45
    %s60 = sphi 0, %s46
    %s64 = sphi 0, %s64
    %s66 = sphi 0, %s64
    %s67 = sphi 0, %s66
    %s81 = sphi 0, %s67
    %s87 = sphi 0, %s89
    %s90 = sphi 0, %s87
    %s91 = sphi 0, %s90
    %s107 = sphi 0, %s91
  $region4: #{tpu_custom_call.1} parent=0 // loop_header_branch
    %12 = sbr.rel (%p10) target = $region8
  $region5: #{tpu_custom_call.1} parent=0 // loop_body
    %s14 = ssub.s32 %s9, 1
    %s15 = ssub.s32 %s9, 2
    %s16 = sadd.s32 %s9, 1
    %s17 = ssub.s32 %s9, %s16
    %p18 = scmp.eq.s32.totalorder %s17, 0
    %s20 = sadd.s32 %s19, 1
    %s21 = scalar_select %p18, %s19, %s20
    %p24 = pneg %p18
    %p25 = scmp.eq.s32.totalorder %s9, 3
    %p26 = por %p24, %p25
    %p27 = scmp.ne.s32.totalorder %s19, %s22
    %p28 = scmp.eq.s32.totalorder %s9, 0
    %p29 = por %p27, %p28
    %p30 = scmp.ne.s32.totalorder %s19, %s22
    %p31 = scmp.eq.s32.totalorder %s14, 3
    %p32 = por %p30, %p31
    %p33 = scmp.ne.s32.totalorder %s22, %s23
    %p34 = scmp.eq.s32.totalorder %s14, 0
    %p35 = por %p33, %p34
    %p36 = scmp.ne.s32.totalorder %s22, %s23
    %p37 = scmp.eq.s32.totalorder %s15, 3
    %p38 = por %p36, %p37
    %p40 = scmp.ne.s32.totalorder %s23, %s39
    %p41 = scmp.eq.s32.totalorder %s15, 0
    %p42 = por %p40, %p41
    %s44 = sadd.s32 %s43, 1
    %p47 = scmp.eq.s32.totalorder %s9, 3
    %p48 = scmp.ne.s32.totalorder %s43, %s45
    %p49 = scmp.eq.s32.totalorder %s9, 0
    %p50 = por %p48, %p49
    %p51 = scmp.ne.s32.totalorder %s43, %s45
    %p52 = scmp.eq.s32.totalorder %s14, 3
    %p53 = por %p51, %p52
    %p54 = scmp.ne.s32.totalorder %s45, %s46
    %p55 = scmp.eq.s32.totalorder %s14, 0
    %p56 = por %p54, %p55
    %p57 = scmp.ne.s32.totalorder %s45, %s46
    %p58 = scmp.eq.s32.totalorder %s15, 3
    %p59 = por %p57, %p58
    %p61 = scmp.ne.s32.totalorder %s46, %s60
    %p62 = scmp.eq.s32.totalorder %s15, 0
    %p63 = por %p61, %p62
    %s65 = sadd.s32 %s64, 1
    %p68 = scmp.eq.s32.totalorder %s9, 3
    %p69 = scmp.ne.s32.totalorder %s64, %s66
    %p70 = scmp.eq.s32.totalorder %s9, 0
    %p71 = por %p69, %p70
    %p72 = scmp.ne.s32.totalorder %s64, %s66
    %p73 = scmp.eq.s32.totalorder %s14, 3
    %p74 = por %p72, %p73
    %p75 = scmp.ne.s32.totalorder %s66, %s67
    %p76 = scmp.eq.s32.totalorder %s14, 0
    %p77 = por %p75, %p76
    %p78 = scmp.ne.s32.totalorder %s66, %s67
    %p79 = scmp.eq.s32.totalorder %s15, 3
    %p80 = por %p78, %p79
    %p82 = scmp.ne.s32.totalorder %s67, %s81
    %p83 = scmp.eq.s32.totalorder %s15, 0
    %p84 = por %p82, %p83
    %s85 = ssub.s32 %s9, %s16
    %p86 = scmp.eq.s32.totalorder %s85, 0
    %s88 = sadd.s32 %s87, 1
    %s89 = scalar_select %p86, %s87, %s88
    %p92 = pneg %p86
    %p93 = scmp.eq.s32.totalorder %s9, 3
    %p94 = por %p92, %p93
    %p95 = scmp.ne.s32.totalorder %s87, %s90
    %p96 = scmp.eq.s32.totalorder %s9, 0
    %p97 = por %p95, %p96
    %p98 = scmp.ne.s32.totalorder %s87, %s90
    %p99 = scmp.eq.s32.totalorder %s14, 3
    %p100 = por %p98, %p99
    %p101 = scmp.ne.s32.totalorder %s90, %s91
    %p102 = scmp.eq.s32.totalorder %s14, 0
    %p103 = por %p101, %p102
    %p104 = scmp.ne.s32.totalorder %s90, %s91
    %p105 = scmp.eq.s32.totalorder %s15, 3
    %p106 = por %p104, %p105
    %p108 = scmp.ne.s32.totalorder %s91, %s107
    %p109 = scmp.eq.s32.totalorder %s15, 0
    %p110 = por %p108, %p109
    %p111 = scmp.le.s32.totalorder 1, %s9
    %p112 = scmp.lt.s32.totalorder %s9, 5
    %p113 = pnand %p111, %p112
    %p114 = pneg %p113
    // Predicated region
    $region9: #{tpu_custom_call.1} parent=5 // pred_check
      _
    $region10: #{tpu_custom_call.1} parent=5 // pred_check_branch
      %116 = sbr.rel (%p113) target = $region12
    $region11: #{tpu_custom_call.1} parent=5 // pred_region
      %s117 = ssub.s32 %s9, 1
      // Predicated region
      $region13: #{tpu_custom_call.1} parent=11 // pred_check
        %p118 = pneg %p56
      $region14: #{tpu_custom_call.1} parent=11 // pred_check_branch
        %120 = sbr.rel (%p118) target = $region16
      $region15: #{tpu_custom_call.1} parent=11 // pred_region
        _
      $region16: #{tpu_custom_call.1} parent=11 // pred_fallthru
        _
      // Predicated region
      $region17: #{tpu_custom_call.1} parent=11 // pred_check
        %p121 = pneg %p77
      $region18: #{tpu_custom_call.1} parent=11 // pred_check_branch
        %123 = sbr.rel (%p121) target = $region20
      $region19: #{tpu_custom_call.1} parent=11 // pred_region
        _
      $region20: #{tpu_custom_call.1} parent=11 // pred_fallthru
        _
    $region12: #{tpu_custom_call.1} parent=5 // pred_fallthru
      _
    %p124 = scmp.lt.s32.totalorder %s9, 4
    // Predicated region
    $region21: #{tpu_custom_call.1} parent=5 // pred_check
      %p125 = pneg %p124
    $region22: #{tpu_custom_call.1} parent=5 // pred_check_branch
      %127 = sbr.rel (%p125) target = $region24
    $region23: #{tpu_custom_call.1} parent=5 // pred_region
      // Predicated region
      $region25: #{tpu_custom_call.1} parent=23 // pred_check
        %p128 = pneg %p29
      $region26: #{tpu_custom_call.1} parent=23 // pred_check_branch
        %130 = sbr.rel (%p128) target = $region28
      $region27: #{tpu_custom_call.1} parent=23 // pred_region
        %s131 = smul.u32 4, %s9
        %p132 = scmp.lt.s32.totalorder %s131, 15
        %s133 = scalar_select %p132, %s131, 15
        %s134 = smul.addr %s133, 8
        %s135 = scalar_lea.vmem %s0, %s134
        %s136 = smul.u32 4, %s9
      $region28: #{tpu_custom_call.1} parent=23 // pred_fallthru
        _
    $region24: #{tpu_custom_call.1} parent=5 // pred_fallthru
      _
    %p137 = scmp.le.s32.totalorder 1, %s9
    %p138 = scmp.lt.s32.totalorder %s9, 5
    %p139 = pnand %p137, %p138
    %p140 = pneg %p139
    // Predicated region
    $region29: #{tpu_custom_call.1} parent=5 // pred_check
      _
    $region30: #{tpu_custom_call.1} parent=5 // pred_check_branch
      %142 = sbr.rel (%p139) target = $region32
    $region31: #{tpu_custom_call.1} parent=5 // pred_region
      %s143 = ssub.s32 %s9, 1
      %s144 = smul.u32 4, %s14
      %p145 = scmp.lt.s32.totalorder %s144, 15
      %s146 = scalar_select %p145, %s144, 15
      %s147 = smul.addr %s146, 8
      %s148 = scalar_lea.vmem %s0, %s147
      %p149 = pneg %p35
      %p150 = pneg %p32
      %p151 = pneg %p56
      %p152 = pneg %p53
      %p153 = pneg %p77
      %p154 = pneg %p74
      %p155 = pneg %p103
      %p156 = pneg %p100
      %s157 = smul.u32 2, %s14
      %p158 = scmp.lt.s32.totalorder %s157, 7
      %s159 = scalar_select %p158, %s157, 7
      %s160 = smul.addr %s159, 8
      %s161 = scalar_lea.vmem %s3, %s160
      %s162 = smul.u32 4, %s14
      %p163 = scmp.lt.s32.totalorder %s162, 15
      %s164 = scalar_select %p163, %s162, 15
      %s165 = smul.addr %s164, 8
      %s166 = scalar_lea.vmem %s0, %s165
      %s167 = smul.u32 4, %s14
      %s168 = smul.u32 2, %s14
      %p169 = scmp.lt.s32.totalorder %s168, 7
      %s170 = scalar_select %p169, %s168, 7
      %s171 = smul.addr %s170, 8
      %s172 = scalar_lea.vmem %s3, %s171
      %s173 = smul.u32 2, %s14
      %v174 = vld [vmem:[%s166] ss:$2 sm:$0xff]
      %s175 = scalar_lea.vmem %s166, 16
      %v176 = vld [vmem:[%s175] ss:$2 sm:$0xff]
      %s177 = scalar_lea.vmem %s166, 1
      %v178 = vld [vmem:[%s177] ss:$2 sm:$0xff]
      %s179 = scalar_lea.vmem %s166, 17
      %v180 = vld [vmem:[%s179] ss:$2 sm:$0xff]
      %vm183 = vcmask 1040384
      %v184 = vrot.slane %v178, 7
      %v185 = vrot.slane %v180, 7
      %v186 = vsel %vm183, %v184, %v185
      %v189 = vsel %vm183, %v178, %v184
      %v190 = vld [vmem:[%s2] sm:$0xff]
      %v191 = vld [vmem:[%s2 + $0x8] sm:$0xff]
      %vm192 = vcmp.gt.f32.partialorder %v190, 0.5
      %vm193 = vcmp.gt.f32.partialorder %v191, 0.5
      %v194 = vsel %vm192, 1, 0
      %v195 = vsel %vm193, 1, 0
      %196 = vset.pattern.permute.xlu0 0
      %197 = vperm.xlu0 %196, %v194
      %v198 = vpop.permute.xlu0 %197
      %199 = vset.pattern.permute.xlu0 0
      %200 = vperm.xlu0 %199, %v195
      %v201 = vpop.permute.xlu0 %200
      %vm202 = vcmp.eq.s32.totalorder %v198, 1
      %vm203 = vcmp.eq.s32.totalorder %v201, 1
      %v204 = vsel %vm202, %v178, %v189
      %v205 = vsel %vm203, %v180, %v186
      %v206 = vadd.f32 %v204, %v178
      %v207 = vadd.f32 %v205, %v180
      %v208 = vadd.f32 %v174, %v174
      %v209 = vadd.f32 %v176, %v176
      %v210 = vadd.f32 %v206, %v208
      %v211 = vadd.f32 %v207, %v209
      %v212 = vld [vmem:[%s1] sm:$0xff]
      %v213 = vld [vmem:[%s1 + $0x8] sm:$0xff]
      %vm214 = vcmask 130048
      %v216 = vsel %vm214, %v210, 0
      %v219 = vsel %vm214, %v211, 0
      %221 = vmatprep.subr.mxu0 0.0
      %v222 = vand.u32 %v212, 4294901760
      %223 = vmatpush1.msra.mxu0 %v222
      %224 = vmatprep.subr.mxu0 0.0
      %v225 = vand.u32 %v213, 4294901760
      %226 = vmatpush1.msra.mxu0 %v225
      %227 = vmatprep.subr.mxu0 0.0
      %228 = vmatpush1.msra.mxu0 0.0
      %229 = vmatprep.subr.mxu0 0.0
      %230 = vmatpush1.msra.mxu0 0.0
      %231 = vmatprep.subr.mxu0 0.0
      %232 = vmatpush1.msra.mxu0 0.0
      %233 = vmatprep.subr.mxu0 0.0
      %234 = vmatpush1.msra.mxu0 0.0
      %235 = vmatprep.subr.mxu0 0.0
      %236 = vmatpush1.msra.mxu0 0.0
      %237 = vmatprep.subr.mxu0 0.0
      %238 = vmatpush1.msra.mxu0 0.0
      %239 = vmatprep.subr.mxu0 0.0
      %240 = vmatpush1.msra.mxu0 0.0
      %241 = vmatprep.subr.mxu0 0.0
      %242 = vmatpush1.msra.mxu0 0.0
      %243 = vmatprep.subr.mxu0 0.0
      %244 = vmatpush1.msra.mxu0 0.0
      %245 = vmatprep.subr.mxu0 0.0
      %246 = vmatpush1.msra.mxu0 0.0
      %247 = vmatprep.subr.mxu0 0.0
      %248 = vmatpush1.msra.mxu0 0.0
      %249 = vmatprep.subr.mxu0 0.0
      %250 = vmatpush1.msra.mxu0 0.0
      %251 = vmatprep.subr.mxu0 0.0
      %252 = vmatpush1.msra.mxu0 0.0
      %253 = vmatprep.subr.mxu0 0.0
      %254 = vmatpush1.msra.mxu0 0.0
      %255 = vmatprep.subr.mxu0 0.0
      %256 = vmatpush1.msra.mxu0 0.0
      %257 = vmatprep.subr.mxu0 0.0
      %258 = vmatpush1.msra.mxu0 0.0
      %259 = vmatprep.subr.mxu0 0.0
      %260 = vmatpush1.msra.mxu0 0.0
      %261 = vmatprep.subr.mxu0 0.0
      %262 = vmatpush1.msra.mxu0 0.0
      %263 = vmatprep.subr.mxu0 0.0
      %264 = vmatpush1.msra.mxu0 0.0
      %265 = vmatprep.subr.mxu0 0.0
      %266 = vmatpush1.msra.mxu0 0.0
      %267 = vmatprep.subr.mxu0 0.0
      %268 = vmatpush1.msra.mxu0 0.0
      %269 = vmatprep.subr.mxu0 0.0
      %270 = vmatpush1.msra.mxu0 0.0
      %271 = vmatprep.subr.mxu0 0.0
      %272 = vmatpush1.msra.mxu0 0.0
      %273 = vmatprep.subr.mxu0 0.0
      %274 = vmatpush1.msra.mxu0 0.0
      %275 = vmatprep.subr.mxu0 0.0
      %276 = vmatpush1.msra.mxu0 0.0
      %277 = vmatprep.subr.mxu0 0.0
      %278 = vmatpush1.msra.mxu0 0.0
      %279 = vmatprep.subr.mxu0 0.0
      %280 = vmatpush1.msra.mxu0 0.0
      %281 = vmatprep.subr.mxu0 0.0
      %282 = vmatpush1.msra.mxu0 0.0
      %283 = vmatprep.subr.mxu0 0.0
      %284 = vmatpush1.msra.mxu0 0.0
      %285 = vmatprep.subr.mxu0 0.0
      %286 = vmatpush1.msra.mxu0 0.0
      %287 = vmatprep.mubr.f32.mxu0 0.0
      %v288 = vand.u32 %v216, 4294901760
      %v289 = vsub.f32 %v216, %v288
      %v290 = vand.u32 %v289, 4294901760
      %v291 = vsub.f32 %v289, %v290
      %v292 = vand.u32 %v291, 4294901760
      %293 = vmatmul.mubr.f32.gmra.mrb[0].mxu0 %v292
      %v294 = vpop.f32.mrb[0].mxu0
      %v295 = vadd.f32 0.0, %v294
      %v296 = vpop.f32.mrb[0].mxu0
      %297 = vmatprep.mubr.f32.mxu0 0.0
      %v298 = vand.u32 %v219, 4294901760
      %v299 = vsub.f32 %v219, %v298
      %v300 = vand.u32 %v299, 4294901760
      %v301 = vsub.f32 %v299, %v300
      %v302 = vand.u32 %v301, 4294901760
      %303 = vmatmul.mubr.f32.gmra.mrb[0].mxu0 %v302
      %v304 = vpop.f32.mrb[0].mxu0
      %v305 = vadd.f32 0.0, %v304
      %v306 = vpop.f32.mrb[0].mxu0
      %307 = vdwg.mxu0
      %308 = vmatprep.subr.mxu0 0.0
      %v309 = vand.u32 %v212, 4294901760
      %v310 = vsub.f32 %v212, %v309
      %v311 = vand.u32 %v310, 4294901760
      %v312 = vsub.f32 %v310, %v311
      %v313 = vand.u32 %v312, 4294901760
      %314 = vmatpush1.msra.mxu0 %v313
      %315 = vmatprep.subr.mxu0 0.0
      %v316 = vand.u32 %v213, 4294901760
      %v317 = vsub.f32 %v213, %v316
      %v318 = vand.u32 %v317, 4294901760
      %v319 = vsub.f32 %v317, %v318
      %v320 = vand.u32 %v319, 4294901760
      %321 = vmatpush1.msra.mxu0 %v320
      %322 = vmatprep.subr.mxu0 0.0
      %323 = vmatpush1.msra.mxu0 0.0
      %324 = vmatprep.subr.mxu0 0.0
      %325 = vmatpush1.msra.mxu0 0.0
      %326 = vmatprep.subr.mxu0 0.0
      %327 = vmatpush1.msra.mxu0 0.0
      %328 = vmatprep.subr.mxu0 0.0
      %329 = vmatpush1.msra.mxu0 0.0
      %330 = vmatprep.subr.mxu0 0.0
      %331 = vmatpush1.msra.mxu0 0.0
      %332 = vmatprep.subr.mxu0 0.0
      %333 = vmatpush1.msra.mxu0 0.0
      %334 = vmatprep.subr.mxu0 0.0
      %335 = vmatpush1.msra.mxu0 0.0
      %336 = vmatprep.subr.mxu0 0.0
      %337 = vmatpush1.msra.mxu0 0.0
      %338 = vmatprep.subr.mxu0 0.0
      %339 = vmatpush1.msra.mxu0 0.0
      %340 = vmatprep.subr.mxu0 0.0
      %341 = vmatpush1.msra.mxu0 0.0
      %342 = vmatprep.subr.mxu0 0.0
      %343 = vmatpush1.msra.mxu0 0.0
      %344 = vmatprep.subr.mxu0 0.0
      %345 = vmatpush1.msra.mxu0 0.0
      %346 = vmatprep.subr.mxu0 0.0
      %347 = vmatpush1.msra.mxu0 0.0
      %348 = vmatprep.subr.mxu0 0.0
      %349 = vmatpush1.msra.mxu0 0.0
      %350 = vmatprep.subr.mxu0 0.0
      %351 = vmatpush1.msra.mxu0 0.0
      %352 = vmatprep.subr.mxu0 0.0
      %353 = vmatpush1.msra.mxu0 0.0
      %354 = vmatprep.subr.mxu0 0.0
      %355 = vmatpush1.msra.mxu0 0.0
      %356 = vmatprep.subr.mxu0 0.0
      %357 = vmatpush1.msra.mxu0 0.0
      %358 = vmatprep.subr.mxu0 0.0
      %359 = vmatpush1.msra.mxu0 0.0
      %360 = vmatprep.subr.mxu0 0.0
      %361 = vmatpush1.msra.mxu0 0.0
      %362 = vmatprep.subr.mxu0 0.0
      %363 = vmatpush1.msra.mxu0 0.0
      %364 = vmatprep.subr.mxu0 0.0
      %365 = vmatpush1.msra.mxu0 0.0
      %366 = vmatprep.subr.mxu0 0.0
      %367 = vmatpush1.msra.mxu0 0.0
      %368 = vmatprep.subr.mxu0 0.0
      %369 = vmatpush1.msra.mxu0 0.0
      %370 = vmatprep.subr.mxu0 0.0
      %371 = vmatpush1.msra.mxu0 0.0
      %372 = vmatprep.subr.mxu0 0.0
      %373 = vmatpush1.msra.mxu0 0.0
      %374 = vmatprep.subr.mxu0 0.0
      %375 = vmatpush1.msra.mxu0 0.0
      %376 = vmatprep.subr.mxu0 0.0
      %377 = vmatpush1.msra.mxu0 0.0
      %378 = vmatprep.subr.mxu0 0.0
      %379 = vmatpush1.msra.mxu0 0.0
      %380 = vmatprep.subr.mxu0 0.0
      %381 = vmatpush1.msra.mxu0 0.0
      %382 = vmatprep.mubr.f32.mxu0 0.0
      %v383 = vand.u32 %v216, 4294901760
      %384 = vmatmul.mubr.f32.gmra.mrb[0].mxu0 %v383
      %v385 = vpop.f32.mrb[0].mxu0
      %v386 = vadd.f32 %v295, %v385
      %v387 = vpop.f32.mrb[0].mxu0
      %388 = vmatprep.mubr.f32.mxu0 0.0
      %v389 = vand.u32 %v219, 4294901760
      %390 = vmatmul.mubr.f32.gmra.mrb[0].mxu0 %v389
      %v391 = vpop.f32.mrb[0].mxu0
      %v392 = vadd.f32 %v305, %v391
      %v393 = vpop.f32.mrb[0].mxu0
      %394 = vdwg.mxu0
      %395 = vmatprep.subr.mxu0 0.0
      %v396 = vand.u32 %v212, 4294901760
      %v397 = vsub.f32 %v212, %v396
      %398 = vmatpush1.msra.mxu0 %v397
      %399 = vmatprep.subr.mxu0 0.0
      %v400 = vand.u32 %v213, 4294901760
      %v401 = vsub.f32 %v213, %v400
      %402 = vmatpush1.msra.mxu0 %v401
      %403 = vmatprep.subr.mxu0 0.0
      %404 = vmatpush1.msra.mxu0 0.0
      %405 = vmatprep.subr.mxu0 0.0
      %406 = vmatpush1.msra.mxu0 0.0
      %407 = vmatprep.subr.mxu0 0.0
      %408 = vmatpush1.msra.mxu0 0.0
      %409 = vmatprep.subr.mxu0 0.0
      %410 = vmatpush1.msra.mxu0 0.0
      %411 = vmatprep.subr.mxu0 0.0
      %412 = vmatpush1.msra.mxu0 0.0
      %413 = vmatprep.subr.mxu0 0.0
      %414 = vmatpush1.msra.mxu0 0.0
      %415 = vmatprep.subr.mxu0 0.0
      %416 = vmatpush1.msra.mxu0 0.0
      %417 = vmatprep.subr.mxu0 0.0
      %418 = vmatpush1.msra.mxu0 0.0
      %419 = vmatprep.subr.mxu0 0.0
      %420 = vmatpush1.msra.mxu0 0.0
      %421 = vmatprep.subr.mxu0 0.0
      %422 = vmatpush1.msra.mxu0 0.0
      %423 = vmatprep.subr.mxu0 0.0
      %424 = vmatpush1.msra.mxu0 0.0
      %425 = vmatprep.subr.mxu0 0.0
      %426 = vmatpush1.msra.mxu0 0.0
      %427 = vmatprep.subr.mxu0 0.0
      %428 = vmatpush1.msra.mxu0 0.0
      %429 = vmatprep.subr.mxu0 0.0
      %430 = vmatpush1.msra.mxu0 0.0
      %431 = vmatprep.subr.mxu0 0.0
      %432 = vmatpush1.msra.mxu0 0.0
      %433 = vmatprep.subr.mxu0 0.0
      %434 = vmatpush1.msra.mxu0 0.0
      %435 = vmatprep.subr.mxu0 0.0
      %436 = vmatpush1.msra.mxu0 0.0
      %437 = vmatprep.subr.mxu0 0.0
      %438 = vmatpush1.msra.mxu0 0.0
      %439 = vmatprep.subr.mxu0 0.0
      %440 = vmatpush1.msra.mxu0 0.0
      %441 = vmatprep.subr.mxu0 0.0
      %442 = vmatpush1.msra.mxu0 0.0
      %443 = vmatprep.subr.mxu0 0.0
      %444 = vmatpush1.msra.mxu0 0.0
      %445 = vmatprep.subr.mxu0 0.0
      %446 = vmatpush1.msra.mxu0 0.0
      %447 = vmatprep.subr.mxu0 0.0
      %448 = vmatpush1.msra.mxu0 0.0
      %449 = vmatprep.subr.mxu0 0.0
      %450 = vmatpush1.msra.mxu0 0.0
      %451 = vmatprep.subr.mxu0 0.0
      %452 = vmatpush1.msra.mxu0 0.0
      %453 = vmatprep.subr.mxu0 0.0
      %454 = vmatpush1.msra.mxu0 0.0
      %455 = vmatprep.subr.mxu0 0.0
      %456 = vmatpush1.msra.mxu0 0.0
      %457 = vmatprep.subr.mxu0 0.0
      %458 = vmatpush1.msra.mxu0 0.0
      %459 = vmatprep.subr.mxu0 0.0
      %460 = vmatpush1.msra.mxu0 0.0
      %461 = vmatprep.subr.mxu0 0.0
      %462 = vmatpush1.msra.mxu0 0.0
      %463 = vmatprep.mubr.f32.mxu0 0.0
      %v464 = vand.u32 %v216, 4294901760
      %v465 = vsub.f32 %v216, %v464
      %466 = vmatmul.mubr.f32.gmra.mrb[0].mxu0 %v465
      %v467 = vpop.f32.mrb[0].mxu0
      %v468 = vadd.f32 %v386, %v467
      %v469 = vpop.f32.mrb[0].mxu0
      %470 = vmatprep.mubr.f32.mxu0 0.0
      %v471 = vand.u32 %v219, 4294901760
      %v472 = vsub.f32 %v219, %v471
      %473 = vmatmul.mubr.f32.gmra.mrb[0].mxu0 %v472
      %v474 = vpop.f32.mrb[0].mxu0
      %v475 = vadd.f32 %v392, %v474
      %v476 = vpop.f32.mrb[0].mxu0
      %477 = vdwg.mxu0
      %478 = vmatprep.subr.mxu0 0.0
      %v479 = vand.u32 %v212, 4294901760
      %480 = vmatpush1.msra.mxu0 %v479
      %481 = vmatprep.subr.mxu0 0.0
      %v482 = vand.u32 %v213, 4294901760
      %483 = vmatpush1.msra.mxu0 %v482
      %484 = vmatprep.subr.mxu0 0.0
      %485 = vmatpush1.msra.mxu0 0.0
      %486 = vmatprep.subr.mxu0 0.0
      %487 = vmatpush1.msra.mxu0 0.0
      %488 = vmatprep.subr.mxu0 0.0
      %489 = vmatpush1.msra.mxu0 0.0
      %490 = vmatprep.subr.mxu0 0.0
      %491 = vmatpush1.msra.mxu0 0.0
      %492 = vmatprep.subr.mxu0 0.0
      %493 = vmatpush1.msra.mxu0 0.0
      %494 = vmatprep.subr.mxu0 0.0
      %495 = vmatpush1.msra.mxu0 0.0
      %496 = vmatprep.subr.mxu0 0.0
      %497 = vmatpush1.msra.mxu0 0.0
      %498 = vmatprep.subr.mxu0 0.0
      %499 = vmatpush1.msra.mxu0 0.0
      %500 = vmatprep.subr.mxu0 0.0
      %501 = vmatpush1.msra.mxu0 0.0
      %502 = vmatprep.subr.mxu0 0.0
      %503 = vmatpush1.msra.mxu0 0.0
      %504 = vmatprep.subr.mxu0 0.0
      %505 = vmatpush1.msra.mxu0 0.0
      %506 = vmatprep.subr.mxu0 0.0
      %507 = vmatpush1.msra.mxu0 0.0
      %508 = vmatprep.subr.mxu0 0.0
      %509 = vmatpush1.msra.mxu0 0.0
      %510 = vmatprep.subr.mxu0 0.0
      %511 = vmatpush1.msra.mxu0 0.0
      %512 = vmatprep.subr.mxu0 0.0
      %513 = vmatpush1.msra.mxu0 0.0
      %514 = vmatprep.subr.mxu0 0.0
      %515 = vmatpush1.msra.mxu0 0.0
      %516 = vmatprep.subr.mxu0 0.0
      %517 = vmatpush1.msra.mxu0 0.0
      %518 = vmatprep.subr.mxu0 0.0
      %519 = vmatpush1.msra.mxu0 0.0
      %520 = vmatprep.subr.mxu0 0.0
      %521 = vmatpush1.msra.mxu0 0.0
      %522 = vmatprep.subr.mxu0 0.0
      %523 = vmatpush1.msra.mxu0 0.0
      %524 = vmatprep.subr.mxu0 0.0
      %525 = vmatpush1.msra.mxu0 0.0
      %526 = vmatprep.subr.mxu0 0.0
      %527 = vmatpush1.msra.mxu0 0.0
      %528 = vmatprep.subr.mxu0 0.0
      %529 = vmatpush1.msra.mxu0 0.0
      %530 = vmatprep.subr.mxu0 0.0
      %531 = vmatpush1.msra.mxu0 0.0
      %532 = vmatprep.subr.mxu0 0.0
      %533 = vmatpush1.msra.mxu0 0.0
      %534 = vmatprep.subr.mxu0 0.0
      %535 = vmatpush1.msra.mxu0 0.0
      %536 = vmatprep.subr.mxu0 0.0
      %537 = vmatpush1.msra.mxu0 0.0
      %538 = vmatprep.subr.mxu0 0.0
      %539 = vmatpush1.msra.mxu0 0.0
      %540 = vmatprep.subr.mxu0 0.0
      %541 = vmatpush1.msra.mxu0 0.0
      %542 = vmatprep.subr.mxu0 0.0
      %543 = vmatpush1.msra.mxu0 0.0
      %544 = vmatprep.mubr.f32.mxu0 0.0
      %v545 = vand.u32 %v216, 4294901760
      %v546 = vsub.f32 %v216, %v545
      %v547 = vand.u32 %v546, 4294901760
      %548 = vmatmul.mubr.f32.gmra.mrb[0].mxu0 %v547
      %v549 = vpop.f32.mrb[0].mxu0
      %v550 = vadd.f32 %v468, %v549
      %v551 = vpop.f32.mrb[0].mxu0
      %552 = vmatprep.mubr.f32.mxu0 0.0
      %v553 = vand.u32 %v219, 4294901760
      %v554 = vsub.f32 %v219, %v553
      %v555 = vand.u32 %v554, 4294901760
      %556 = vmatmul.mubr.f32.gmra.mrb[0].mxu0 %v555
      %v557 = vpop.f32.mrb[0].mxu0
      %v558 = vadd.f32 %v475, %v557
      %v559 = vpop.f32.mrb[0].mxu0
      %560 = vdwg.mxu0
      %561 = vmatprep.subr.mxu0 0.0
      %v562 = vand.u32 %v212, 4294901760
      %v563 = vsub.f32 %v212, %v562
      %v564 = vand.u32 %v563, 4294901760
      %565 = vmatpush1.msra.mxu0 %v564
      %566 = vmatprep.subr.mxu0 0.0
      %v567 = vand.u32 %v213, 4294901760
      %v568 = vsub.f32 %v213, %v567
      %v569 = vand.u32 %v568, 4294901760
      %570 = vmatpush1.msra.mxu0 %v569
      %571 = vmatprep.subr.mxu0 0.0
      %572 = vmatpush1.msra.mxu0 0.0
      %573 = vmatprep.subr.mxu0 0.0
      %574 = vmatpush1.msra.mxu0 0.0
      %575 = vmatprep.subr.mxu0 0.0
      %576 = vmatpush1.msra.mxu0 0.0
      %577 = vmatprep.subr.mxu0 0.0
      %578 = vmatpush1.msra.mxu0 0.0
      %579 = vmatprep.subr.mxu0 0.0
      %580 = vmatpush1.msra.mxu0 0.0
      %581 = vmatprep.subr.mxu0 0.0
      %582 = vmatpush1.msra.mxu0 0.0
      %583 = vmatprep.subr.mxu0 0.0
      %584 = vmatpush1.msra.mxu0 0.0
      %585 = vmatprep.subr.mxu0 0.0
      %586 = vmatpush1.msra.mxu0 0.0
      %587 = vmatprep.subr.mxu0 0.0
      %588 = vmatpush1.msra.mxu0 0.0
      %589 = vmatprep.subr.mxu0 0.0
      %590 = vmatpush1.msra.mxu0 0.0
      %591 = vmatprep.subr.mxu0 0.0
      %592 = vmatpush1.msra.mxu0 0.0
      %593 = vmatprep.subr.mxu0 0.0
      %594 = vmatpush1.msra.mxu0 0.0
      %595 = vmatprep.subr.mxu0 0.0
      %596 = vmatpush1.msra.mxu0 0.0
      %597 = vmatprep.subr.mxu0 0.0
      %598 = vmatpush1.msra.mxu0 0.0
      %599 = vmatprep.subr.mxu0 0.0
      %600 = vmatpush1.msra.mxu0 0.0
      %601 = vmatprep.subr.mxu0 0.0
      %602 = vmatpush1.msra.mxu0 0.0
      %603 = vmatprep.subr.mxu0 0.0
      %604 = vmatpush1.msra.mxu0 0.0
      %605 = vmatprep.subr.mxu0 0.0
      %606 = vmatpush1.msra.mxu0 0.0
      %607 = vmatprep.subr.mxu0 0.0
      %608 = vmatpush1.msra.mxu0 0.0
      %609 = vmatprep.subr.mxu0 0.0
      %610 = vmatpush1.msra.mxu0 0.0
      %611 = vmatprep.subr.mxu0 0.0
      %612 = vmatpush1.msra.mxu0 0.0
      %613 = vmatprep.subr.mxu0 0.0
      %614 = vmatpush1.msra.mxu0 0.0
      %615 = vmatprep.subr.mxu0 0.0
      %616 = vmatpush1.msra.mxu0 0.0
      %617 = vmatprep.subr.mxu0 0.0
      %618 = vmatpush1.msra.mxu0 0.0
      %619 = vmatprep.subr.mxu0 0.0
      %620 = vmatpush1.msra.mxu0 0.0
      %621 = vmatprep.subr.mxu0 0.0
      %622 = vmatpush1.msra.mxu0 0.0
      %623 = vmatprep.subr.mxu0 0.0
      %624 = vmatpush1.msra.mxu0 0.0
      %625 = vmatprep.subr.mxu0 0.0
      %626 = vmatpush1.msra.mxu0 0.0
      %627 = vmatprep.subr.mxu0 0.0
      %628 = vmatpush1.msra.mxu0 0.0
      %629 = vmatprep.subr.mxu0 0.0
      %630 = vmatpush1.msra.mxu0 0.0
      %631 = vmatprep.mubr.f32.mxu0 0.0
      %v632 = vand.u32 %v216, 4294901760
      %633 = vmatmul.mubr.f32.gmra.mrb[0].mxu0 %v632
      %v634 = vpop.f32.mrb[0].mxu0
      %v635 = vadd.f32 %v550, %v634
      %v636 = vpop.f32.mrb[0].mxu0
      %637 = vmatprep.mubr.f32.mxu0 0.0
      %v638 = vand.u32 %v219, 4294901760
      %639 = vmatmul.mubr.f32.gmra.mrb[0].mxu0 %v638
      %v640 = vpop.f32.mrb[0].mxu0
      %v641 = vadd.f32 %v558, %v640
      %v642 = vpop.f32.mrb[0].mxu0
      %643 = vdwg.mxu0
      %644 = vmatprep.subr.mxu0 0.0
      %v645 = vand.u32 %v212, 4294901760
      %646 = vmatpush1.msra.mxu0 %v645
      %647 = vmatprep.subr.mxu0 0.0
      %v648 = vand.u32 %v213, 4294901760
      %649 = vmatpush1.msra.mxu0 %v648
      %650 = vmatprep.subr.mxu0 0.0
      %651 = vmatpush1.msra.mxu0 0.0
      %652 = vmatprep.subr.mxu0 0.0
      %653 = vmatpush1.msra.mxu0 0.0
      %654 = vmatprep.subr.mxu0 0.0
      %655 = vmatpush1.msra.mxu0 0.0
      %656 = vmatprep.subr.mxu0 0.0
      %657 = vmatpush1.msra.mxu0 0.0
      %658 = vmatprep.subr.mxu0 0.0
      %659 = vmatpush1.msra.mxu0 0.0
      %660 = vmatprep.subr.mxu0 0.0
      %661 = vmatpush1.msra.mxu0 0.0
      %662 = vmatprep.subr.mxu0 0.0
      %663 = vmatpush1.msra.mxu0 0.0
      %664 = vmatprep.subr.mxu0 0.0
      %665 = vmatpush1.msra.mxu0 0.0
      %666 = vmatprep.subr.mxu0 0.0
      %667 = vmatpush1.msra.mxu0 0.0
      %668 = vmatprep.subr.mxu0 0.0
      %669 = vmatpush1.msra.mxu0 0.0
      %670 = vmatprep.subr.mxu0 0.0
      %671 = vmatpush1.msra.mxu0 0.0
      %672 = vmatprep.subr.mxu0 0.0
      %673 = vmatpush1.msra.mxu0 0.0
      %674 = vmatprep.subr.mxu0 0.0
      %675 = vmatpush1.msra.mxu0 0.0
      %676 = vmatprep.subr.mxu0 0.0
      %677 = vmatpush1.msra.mxu0 0.0
      %678 = vmatprep.subr.mxu0 0.0
      %679 = vmatpush1.msra.mxu0 0.0
      %680 = vmatprep.subr.mxu0 0.0
      %681 = vmatpush1.msra.mxu0 0.0
      %682 = vmatprep.subr.mxu0 0.0
      %683 = vmatpush1.msra.mxu0 0.0
      %684 = vmatprep.subr.mxu0 0.0
      %685 = vmatpush1.msra.mxu0 0.0
      %686 = vmatprep.subr.mxu0 0.0
      %687 = vmatpush1.msra.mxu0 0.0
      %688 = vmatprep.subr.mxu0 0.0
      %689 = vmatpush1.msra.mxu0 0.0
      %690 = vmatprep.subr.mxu0 0.0
      %691 = vmatpush1.msra.mxu0 0.0
      %692 = vmatprep.subr.mxu0 0.0
      %693 = vmatpush1.msra.mxu0 0.0
      %694 = vmatprep.subr.mxu0 0.0
      %695 = vmatpush1.msra.mxu0 0.0
      %696 = vmatprep.subr.mxu0 0.0
      %697 = vmatpush1.msra.mxu0 0.0
      %698 = vmatprep.subr.mxu0 0.0
      %699 = vmatpush1.msra.mxu0 0.0
      %700 = vmatprep.subr.mxu0 0.0
      %701 = vmatpush1.msra.mxu0 0.0
      %702 = vmatprep.subr.mxu0 0.0
      %703 = vmatpush1.msra.mxu0 0.0
      %704 = vmatprep.subr.mxu0 0.0
      %705 = vmatpush1.msra.mxu0 0.0
      %706 = vmatprep.subr.mxu0 0.0
      %707 = vmatpush1.msra.mxu0 0.0
      %708 = vmatprep.subr.mxu0 0.0
      %709 = vmatpush1.msra.mxu0 0.0
      %710 = vmatprep.mubr.f32.mxu0 0.0
      %v711 = vand.u32 %v216, 4294901760
      %712 = vmatmul.mubr.f32.gmra.mrb[0].mxu0 %v711
      %v713 = vpop.f32.mrb[0].mxu0
      %v714 = vadd.f32 %v635, %v713
      %v715 = vpop.f32.mrb[0].mxu0
      %716 = vmatprep.mubr.f32.mxu0 0.0
      %v717 = vand.u32 %v219, 4294901760
      %718 = vmatmul.mubr.f32.gmra.mrb[0].mxu0 %v717
      %v719 = vpop.f32.mrb[0].mxu0
      %v720 = vadd.f32 %v641, %v719
      %v721 = vpop.f32.mrb[0].mxu0
      %722 = vdwg.mxu0
      %vm723 = vcmask 64512
      %724 = vst.msk [vmem:[%s172] sm:$0xff] %vm723, %v714
      %725 = vst.msk [vmem:[%s172 + $0x8] sm:$0xff] %vm723, %v720
      %s726 = smul.u32 2, %s14
      %p727 = scmp.lt.s32.totalorder %s726, 7
      %s728 = scalar_select %p727, %s726, 7
      %s729 = smul.addr %s728, 8
      %s730 = scalar_lea.vmem %s3, %s729
      // Predicated region
      $region33: #{tpu_custom_call.1} parent=31 // pred_check
        %p731 = pneg %p100
      $region34: #{tpu_custom_call.1} parent=31 // pred_check_branch
        %733 = sbr.rel (%p731) target = $region36
      $region35: #{tpu_custom_call.1} parent=31 // pred_region
        %s734 = smul.u32 2, %s14
      $region36: #{tpu_custom_call.1} parent=31 // pred_fallthru
        _
    $region32: #{tpu_custom_call.1} parent=5 // pred_fallthru
      _
    %p735 = scmp.le.s32.totalorder 2, %s9
    // Predicated region
    $region37: #{tpu_custom_call.1} parent=5 // pred_check
      %p736 = pneg %p735
    $region38: #{tpu_custom_call.1} parent=5 // pred_check_branch
      %738 = sbr.rel (%p736) target = $region40
    $region39: #{tpu_custom_call.1} parent=5 // pred_region
      %s739 = ssub.s32 %s9, 2
      // Predicated region
      $region41: #{tpu_custom_call.1} parent=39 // pred_check
        %p740 = pneg %p106
      $region42: #{tpu_custom_call.1} parent=39 // pred_check_branch
        %742 = sbr.rel (%p740) target = $region44
      $region43: #{tpu_custom_call.1} parent=39 // pred_region
        %s743 = smul.u32 2, %s15
        %p744 = scmp.lt.s32.totalorder %s743, 7
        %s745 = scalar_select %p744, %s743, 7
        %s746 = smul.addr %s745, 8
        %s747 = scalar_lea.vmem %s3, %s746
      $region44: #{tpu_custom_call.1} parent=39 // pred_fallthru
        _
    $region40: #{tpu_custom_call.1} parent=5 // pred_fallthru
      _
  $region6: #{tpu_custom_call.1} parent=0 // loop_footer
    %s13 = sadd.s32 1, %s9
  $region7: #{tpu_custom_call.1} parent=0 // loop_footer_branch
    %8 = sbr.rel target = $region3
  $region8: #{tpu_custom_call.1} parent=0 // loop_exit
    _

</llo_original>
